<compile_context>
chip_gen: v7x
topology: tpu7x:2x2x1
jax: 0.10.0
libtpu: 0.0.40
codegen_flags: <defaults>
</compile_context>

<pallas_src>
import numpy as np
import jax
import jax.numpy as jnp
from jax.experimental import pallas as pl
from jax.experimental.pallas import tpu as pltpu


def _round_up(x, m):
    return ((x + m - 1) // m) * m


def _default_row_tile():
    # 128 fills v5e's 128x128 MXUs; 256 fills v6e/v7x's 256x256 MXUs.
    try:
        kind = jax.devices()[0].device_kind.lower()
    except Exception:
        return 128
    if any(v in kind for v in ("v2", "v3", "v4", "v5")):
        return 128
    if any(v in kind for v in ("v6", "v7", "7x")):
        return 256
    return 128


# ----------------------------------------------------------------------------
# Pallas kernels
# ----------------------------------------------------------------------------

def _mean_pool_score_kernel(h_ref, m_ref, ws_ref, feat_ref, score_ref):
    # h: (tnt, L, H)  m: (tnt, L)  ws: (H, 128) -> feat: (tnt, Hp)  score: (tnt, 128)
    h = h_ref[...].astype(jnp.float32)              # cast in-kernel (no host pre-cast pass)
    m = m_ref[...].astype(jnp.float32)
    s = jnp.sum(h * m[:, :, None], axis=1)
    denom = jnp.maximum(jnp.sum(m, axis=1, keepdims=True), 1e-9)
    pooled = s / denom                              # (tnt, H) f32
    H = h_ref.shape[-1]
    Hp = feat_ref.shape[-1]
    if Hp == H:
        feat_ref[...] = pooled
    else:
        # lane-dense padded output: zero the pad lanes, store the H real columns
        feat_ref[...] = jnp.zeros_like(feat_ref)
        feat_ref[:, :H] = pooled
    # fused edge-filter node scores: col 0 = child-side score, col 1 = parent-side score
    score_ref[...] = jnp.dot(pooled, ws_ref[...], preferred_element_type=jnp.float32)


def mean_pool_scores(h, m, w_score, h_pad, *, target_block_bytes=4 << 20):
    """Masked mean over tokens of every tweet + fused per-tweet edge-filter scores.
    Outputs are lane-dense ((tweets, h_pad) and (tweets, 128)); the tweet tile is
    sized so each (tnt, L, H) input block lands near `target_block_bytes`."""
    nt, L, H = h.shape
    itemsize = h.dtype.itemsize
    tnt = max(8, (target_block_bytes // max(L * H * itemsize, 1)) // 8 * 8)
    tnt = min(tnt, _round_up(nt, 8))
    nt_pad = _round_up(nt, tnt)
    if nt_pad != nt:
        h = jnp.pad(h, ((0, nt_pad - nt), (0, 0), (0, 0)))
        m = jnp.pad(m, ((0, nt_pad - nt), (0, 0)))
    feat, score = pl.pallas_call(
        _mean_pool_score_kernel,
        out_shape=(jax.ShapeDtypeStruct((nt_pad, h_pad), jnp.float32),
                   jax.ShapeDtypeStruct((nt_pad, 128), jnp.float32)),
        grid=(nt_pad // tnt,),
        in_specs=[pl.BlockSpec((tnt, L, H), lambda i: (i, 0, 0)),
                  pl.BlockSpec((tnt, L), lambda i: (i, 0)),
                  pl.BlockSpec((H, 128), lambda i: (0, 0))],
        out_specs=[pl.BlockSpec((tnt, h_pad), lambda i: (i, 0)),
                   pl.BlockSpec((tnt, 128), lambda i: (i, 0))],
        compiler_params=pltpu.CompilerParams(dimension_semantics=("parallel",)),
    )(h, m, w_score)
    return feat[:nt], score[:nt]


def _fused_gcn_kernel(a_ref, p_ref, x0_hbm, w1_hbm, b1_hbm, w2_hbm, b2_hbm,
                      wfc_hbm, bfc_hbm, out_ref,
                      x0_s, x1_s, w1_s, b1_s, w2_s, b2_s, wfc_s, bfc_s,
                      tree_s, dma_sems):
    # grid = (layer, row_tile), both sequential:
    #   layer 0: x1[rows i] = relu((A_tile @ x0) @ W1 + b1)      -> VMEM scratch (bf16)
    #   layer 1: tree_acc  += P[:, rows i] @ relu((A_tile @ x1) @ W2 + b2)
    #   last step: out = tanh(tree_acc @ Wfc + bfc)
    tm = a_ref.shape[0]
    layer = pl.program_id(0)
    i = pl.program_id(1)
    row0 = pl.multiple_of(i * tm, tm)

    @pl.when(jnp.logical_and(layer == 0, i == 0))
    def _load_residents():
        # single-buffered residents: one manual DMA each, HBM(ANY) -> VMEM scratch
        copies = [
            pltpu.make_async_copy(x0_hbm, x0_s, dma_sems.at[0]),
            pltpu.make_async_copy(w1_hbm, w1_s, dma_sems.at[1]),
            pltpu.make_async_copy(b1_hbm, b1_s, dma_sems.at[2]),
            pltpu.make_async_copy(w2_hbm, w2_s, dma_sems.at[3]),
            pltpu.make_async_copy(b2_hbm, b2_s, dma_sems.at[4]),
            pltpu.make_async_copy(wfc_hbm, wfc_s, dma_sems.at[5]),
            pltpu.make_async_copy(bfc_hbm, bfc_s, dma_sems.at[6]),
        ]
        for c in copies:
            c.start()
        for c in copies:
            c.wait()
        tree_s[...] = jnp.zeros_like(tree_s)

    @pl.when(layer == 0)
    def _layer0():
        ax = jnp.dot(a_ref[...], x0_s[...], preferred_element_type=jnp.float32)
        h1 = jnp.dot(ax.astype(jnp.bfloat16), w1_s[...],
                     preferred_element_type=jnp.float32) + b1_s[...]
        x1_s[pl.ds(row0, tm), :] = jnp.maximum(h1, 0.0).astype(jnp.bfloat16)
        # TODO(synk): F.dropout(p=0.1) after layer 0 is skipped (eval-mode forward only).

    @pl.when(layer == 1)
    def _layer1():
        ax = jnp.dot(a_ref[...], x1_s[...], preferred_element_type=jnp.float32)
        h2 = jnp.maximum(
            jnp.dot(ax.astype(jnp.bfloat16), w2_s[...],
                    preferred_element_type=jnp.float32) + b2_s[...], 0.0)
        # scatter_mean as a streamed (B, tm) @ (tm, Hp) accumulation -> no (N, Hp) x2 scratch
        tree_s[...] += jnp.dot(p_ref[...], h2, preferred_element_type=jnp.float32)

    @pl.when(jnp.logical_and(layer == 1, i == pl.num_programs(1) - 1))
    def _finalize():
        out_ref[...] = jnp.tanh(
            jnp.dot(tree_s[...].astype(jnp.bfloat16), wfc_s[...],
                    preferred_element_type=jnp.float32) + bfc_s[...])


def fused_gcn_pool_fc(a_hat, pool, x0, w1, b1, w2, b2, wfc, bfc, *, tm):
    """Fused: 2x GCNConv (relu(A_hat @ X @ W + b)) -> scatter_mean -> fc -> tanh.

    A_hat row tiles and P column tiles are streamed (double-buffered) from HBM;
    x0 / weights / biases are DMA'd ONCE into single-buffered VMEM scratch; the
    layer-0 output x1 is resident in VMEM (bf16); scatter_mean is accumulated
    per tile into a tiny (B, Hp) f32 buffer."""
    n_pad, h_pad = x0.shape
    b = pool.shape[0]
    n_rt = n_pad // tm
    bpad = max(b, 8)

    # explicit VMEM budget: resident scratch + double-buffered streamed tiles + headroom
    resident = (2 * n_pad * h_pad * 2        # x0_s + x1_s (bf16)
                + 3 * h_pad * h_pad * 2      # W1, W2, Wfc (bf16)
                + 3 * 8 * h_pad * 4          # biases (f32, sublane padded)
                + bpad * h_pad * 4)          # scatter_mean accumulator
    streamed = (2 * tm * n_pad * 2           # A_hat tile x2 (bf16)
                + 2 * bpad * tm * 4          # P tile x2
                + 2 * bpad * h_pad * 4)      # output block x2
    vmem_limit = int(1.5 * (resident + streamed)) + (2 << 20)
    vmem_limit = min(max(vmem_limit, 8 << 20), 96 << 20)

    hbm = pl.BlockSpec(memory_space=pl.ANY)
    return pl.pallas_call(
        _fused_gcn_kernel,
        out_shape=jax.ShapeDtypeStruct((b, h_pad), jnp.float32),
        grid_spec=pltpu.PrefetchScalarGridSpec(
            num_scalar_prefetch=0,
            grid=(2, n_rt),                                       # (layer, row tile)
            in_specs=[
                pl.BlockSpec((tm, n_pad), lambda l, i: (i, 0)),   # A_hat row tile (bf16)
                pl.BlockSpec((b, tm), lambda l, i: (0, i)),       # P column tile (f32)
                hbm, hbm, hbm, hbm, hbm, hbm, hbm,                # x0, W1, b1, W2, b2, Wfc, bfc
            ],
            out_specs=pl.BlockSpec((b, h_pad), lambda l, i: (0, 0)),
            scratch_shapes=[
                pltpu.VMEM((n_pad, h_pad), jnp.bfloat16),   # x0 (resident, single buffer)
                pltpu.VMEM((n_pad, h_pad), jnp.bfloat16),   # x1 = relu(gcn0(x0))
                pltpu.VMEM((h_pad, h_pad), jnp.bfloat16),   # W1
                pltpu.VMEM((1, h_pad), jnp.float32),        # b1
                pltpu.VMEM((h_pad, h_pad), jnp.bfloat16),   # W2
                pltpu.VMEM((1, h_pad), jnp.float32),        # b2
                pltpu.VMEM((h_pad, h_pad), jnp.bfloat16),   # Wfc
                pltpu.VMEM((1, h_pad), jnp.float32),        # bfc
                pltpu.VMEM((b, h_pad), jnp.float32),        # scatter_mean accumulator
                pltpu.SemaphoreType.DMA((7,)),
            ]),
        compiler_params=pltpu.CompilerParams(
            # cross-tile state (x1 / tree accumulator) -> both axes sequential.
            # TODO(synk): on v7x (2 TCs) add a leading 'parallel' axis over independent
            # graphs (per-graph scratch) so the second TensorCore is used.
            dimension_semantics=("arbitrary", "arbitrary"),
            vmem_limit_bytes=vmem_limit),
    )(a_hat, pool, x0, w1, b1, w2, b2, wfc, bfc)


def _fc_tanh_kernel(x_ref, w_ref, b_ref, o_ref):
    o_ref[...] = jnp.tanh(
        jnp.dot(x_ref[...].astype(jnp.bfloat16), w_ref[...],
                preferred_element_type=jnp.float32) + b_ref[...])


def fc_tanh(x, w, b):
    # no-graph fallback branch (tiny), single block
    bsz, h_pad = x.shape
    return pl.pallas_call(
        _fc_tanh_kernel,
        out_shape=jax.ShapeDtypeStruct((bsz, h_pad), jnp.float32),
        grid=(1,),
        in_specs=[pl.BlockSpec((bsz, h_pad), lambda i: (0, 0)),
                  pl.BlockSpec((h_pad, h_pad), lambda i: (0, 0)),
                  pl.BlockSpec((1, h_pad), lambda i: (0, 0))],
        out_specs=pl.BlockSpec((bsz, h_pad), lambda i: (0, 0)),
    )(x, w, b)


# ----------------------------------------------------------------------------
# Host / XLA glue (static padded shapes -> no per-batch recompilation)
# ----------------------------------------------------------------------------

def gcn_norm_dense(edges, edge_weight, num_nodes):
    """PyG gcn_norm with add_self_loops=True as a dense A_hat (N, N) such that
    out = A_hat @ (X @ W) reproduces GCNConv message passing.  Padded edges carry
    weight 0.  Normalization in f32, result stored bf16 (streamed twice by the
    fused kernel -> halves HBM traffic and runs the MXU in bf16).
    # TODO(synk): replace this dense O(N^2) A_hat with a scalar-prefetched CSR
    # SpMM built tile-by-tile inside the kernel for large sparse trees."""
    loops = jnp.arange(num_nodes, dtype=jnp.int32)
    row = jnp.concatenate([jnp.asarray(edges[0], jnp.int32), loops])
    col = jnp.concatenate([jnp.asarray(edges[1], jnp.int32), loops])
    w = jnp.concatenate([edge_weight.astype(jnp.float32),
                         jnp.ones((num_nodes,), jnp.float32)])
    deg = jnp.zeros((num_nodes,), jnp.float32).at[col].add(w)
    dis = jnp.where(deg > 0, jax.lax.rsqrt(deg), 0.0)
    norm = dis[row] * w * dis[col]
    a = jnp.zeros((num_nodes, num_nodes), jnp.float32).at[col, row].add(norm)
    return a.astype(jnp.bfloat16)


def pack_graph_host(tree_lens, edge_index, trees_per_batch, tm):
    """prepare_batch (ragged packing) with STATIC padded output shapes."""
    B = edge_index.shape[0]
    e_max = edge_index.shape[2]
    T = trees_per_batch
    n_pad = _round_up(B * T, tm)
    e_pad = max(B * e_max, 1)

    node_src = np.zeros((n_pad,), np.int32)      # packed node -> flat tweet (b*T + t)
    node_valid = np.zeros((n_pad,), np.float32)
    pool = np.zeros((B, n_pad), np.float32)      # scatter_mean as a matmul
    edges = np.zeros((2, e_pad), np.int32)       # padded edges point at node 0
    edge_valid = np.zeros((e_pad,), np.float32)  # ... with weight 0

    root, e_off = 0, 0
    for b in range(B):
        n = int(tree_lens[b])
        e = edge_index[b]
        e = e[:, e[0] != -1]        # padding flagged by -1 in row 0
        node_src[root:root + n] = b * T + np.arange(n, dtype=np.int32)
        node_valid[root:root + n] = 1.0
        if n > 0:
            pool[b, root:root + n] = 1.0 / n
        ne = e.shape[1]
        if ne > 0:
            edges[:, e_off:e_off + ne] = e + root
            edge_valid[e_off:e_off + ne] = 1.0
        e_off += ne
        root += n
    if e_off > 0 and int(edges[:, :e_off].max()) > root - 1:
        raise ValueError("Edge index more than number of nodes!")
    return dict(node_src=node_src, node_valid=node_valid, pool=pool,
                edges=edges, edge_valid=edge_valid, n_pad=n_pad,
                num_real_edges=e_off)


def init_params(key, H):
    ks = jax.random.split(key, 8)
    s = 0.1
    return {
        "w_gcn": [jax.random.normal(ks[0], (H, H), jnp.float32) * s,
                  jax.random.normal(ks[1], (H, H), jnp.float32) * s],
        "b_gcn": [jax.random.normal(ks[2], (1, H), jnp.float32) * s,
                  jax.random.normal(ks[3], (1, H), jnp.float32) * s],
        "w_fc": jax.random.normal(ks[4], (H, H), jnp.float32) * s,
        "b_fc": jax.random.normal(ks[5], (1, H), jnp.float32) * s,
        "w_filt": jax.random.normal(ks[6], (2 * H, 1), jnp.float32) * s,
        "b_filt": jax.random.normal(ks[7], (1, 1), jnp.float32) * s,
    }


def pad_params(params, H, h_pad):
    """Lane-pad hidden dims to a multiple of 128; matmul weights in bf16 (f32
    accumulation inside the kernels), biases in f32."""
    dh = h_pad - H

    def pm(w):
        return jnp.pad(w, ((0, dh), (0, dh))).astype(jnp.bfloat16)

    def pb(b):
        return jnp.pad(b, ((0, 0), (0, dh))).astype(jnp.float32)

    # edge-filter Linear(2H, 1): split into per-tweet child / parent score columns
    w_score = jnp.zeros((H, 128), jnp.float32)
    w_score = w_score.at[:, 0].set(params["w_filt"][:H, 0])   # child half
    w_score = w_score.at[:, 1].set(params["w_filt"][H:, 0])   # parent half
    return {
        "w_gcn": [pm(params["w_gcn"][0]), pm(params["w_gcn"][1])],
        "b_gcn": [pb(params["b_gcn"][0]), pb(params["b_gcn"][1])],
        "w_fc": pm(params["w_fc"]),
        "b_fc": pb(params["b_fc"]),
        "w_score": w_score,
        "b_filt": params["b_filt"][0, 0],
    }


def gcn_pooler_forward(params, hidden_states, attention_msk, tree_lens, edge_index,
                       *, max_tweet_length, gcn_type="td", edge_filter=True,
                       row_tile=None):
    B, S, H = hidden_states.shape
    L = max_tweet_length
    T = S // L
    h_pad = _round_up(H, 128)
    if row_tile is None:
        row_tile = _default_row_tile()      # 128 (v5e) / 256 (v6e, v7x)
    pp = pad_params(params, H, h_pad)

    # torch.stack(torch.split(..., L, dim=1), dim=1) == reshape (B, T, L, H)
    hs = hidden_states.reshape(B, T, L, H)
    am = attention_msk.reshape(B, T, L)

    if edge_index is None:
        te = jnp.pad(hs[:, 0, 0, :].astype(jnp.float32), ((0, 0), (0, h_pad - H)))
        return fc_tanh(te, pp["w_fc"], pp["b_fc"])[:, :H]

    # 1) masked mean pooling of every tweet + fused edge-filter scores (Pallas, parallel)
    pooled, scores = mean_pool_scores(hs.reshape(B * T, L, H),
                                      am.reshape(B * T, L),
                                      pp["w_score"], h_pad)      # (B*T, h_pad), (B*T, 128)

    # 2) prepare_batch (host glue) -> static padded shapes, packed node features
    child_idx = 1 if gcn_type == "td" else 0
    parent_idx = 1 - child_idx
    pack = pack_graph_host(np.asarray(tree_lens), np.asarray(edge_index), T, row_tile)
    n_pad = pack["n_pad"]
    node_src = pack["node_src"]
    nodes0 = (pooled[node_src] * jnp.asarray(pack["node_valid"])[:, None]
              ).astype(jnp.bfloat16)
    # TODO(synk): gather nodes0 inside the fused kernel (scalar-prefetched node_src)
    # to avoid this (n_pad, h_pad) HBM materialization + re-read.

    # 3) edge filter: per-edge sigmoid from the fused per-tweet scores (E scalars, XLA)
    edges = pack["edges"]
    edge_valid = jnp.asarray(pack["edge_valid"])
    if edge_filter and pack["num_real_edges"] > 0:
        ew = jax.nn.sigmoid(scores[node_src[edges[child_idx]], 0]
                            + scores[node_src[edges[parent_idx]], 1]
                            + pp["b_filt"]) * edge_valid
    else:
        ew = edge_valid                                    # GCNConv default weight 1

    # 4) dense normalized adjacency with self loops (XLA scatter glue, bf16)
    a_hat = gcn_norm_dense(edges, ew, n_pad)

    # 5) fused: relu(A@X@W1+b1) -> relu(A@.@W2+b2) -> scatter_mean -> fc -> tanh
    out = fused_gcn_pool_fc(a_hat, jnp.asarray(pack["pool"]), nodes0,
                            pp["w_gcn"][0], pp["b_gcn"][0],
                            pp["w_gcn"][1], pp["b_gcn"][1],
                            pp["w_fc"], pp["b_fc"], tm=row_tile)
    return out[:, :H]


# ----------------------------------------------------------------------------
# Example run
# ----------------------------------------------------------------------------

if __name__ == "__main__":
    B, T, L, H = 2, 8, 8, 32          # batch, trees/batch, max_tweet_length, hidden
    key = jax.random.PRNGKey(0)
    k_hs, k_msk, k_par = jax.random.split(key, 3)

    hidden_states = jax.random.normal(k_hs, (B, T * L, H), jnp.float32)
    attention_msk = (jax.random.uniform(k_msk, (B, T * L)) > 0.3).astype(jnp.float32)
    attention_msk = attention_msk.at[:, ::L].set(1.0)   # >= 1 valid token per tweet

    tree_lens = np.array([5, 7], dtype=np.int32)
    # edge_index[b] = (2, E_max), padded with -1 in row 0
    edge_index = np.array(
        [
            [[0, 0, 1, 1, -1, -1, -1], [1, 2, 3, 4, -1, -1, -1]],
            [[0, 0, 1, 2, 2, 3, -1],  [1, 2, 3, 4, 5, 6, -1]],
        ],
        dtype=np.int32,
    )

    params = init_params(k_par, H)

    out = gcn_pooler_forward(
        params, hidden_states, attention_msk, tree_lens, edge_index,
        max_tweet_length=L, gcn_type="td", edge_filter=True,
    )
    out = jax.block_until_ready(out)
    assert out.shape == (B, H)
    assert bool(jnp.all(jnp.isfinite(out)))

    # no-graph branch: CLS-style pooling + fc + tanh
    out2 = jax.block_until_ready(
        gcn_pooler_forward(params, hidden_states, attention_msk, tree_lens, None,
                           max_tweet_length=L, gcn_type="td", edge_filter=True))
    assert out2.shape == (B, H)
    assert bool(jnp.all(jnp.isfinite(out2)))

    print("KERNEL_OK")
</pallas_src>

<mosaic_0001>
module attributes {stable_mosaic.version = 11 : i64} {
  func.func @_mean_pool_score_kernel(%arg0: i32, %arg1: memref<16x8x32xf32, #tpu.memory_space<vmem>>, %arg2: memref<16x8xf32, #tpu.memory_space<vmem>>, %arg3: memref<32x128xf32, #tpu.memory_space<vmem>>, %arg4: memref<16x128xf32, #tpu.memory_space<vmem>>, %arg5: memref<16x128xf32, #tpu.memory_space<vmem>>) attributes {dimension_semantics = [#tpu.dimension_semantics<parallel>], iteration_bounds = array<i64: 1>, scalar_prefetch = 0 : i64, scratch_operands = 0 : i64, tpu.core_type = #tpu.core_type<tc>, window_params = [{transform_indices = @transform_0, window_bounds = array<i64: 16, 8, 32>}, {transform_indices = @transform_1, window_bounds = array<i64: 16, 8>}, {pipeline_mode = #tpu.pipeline_mode<synchronous>, transform_indices = @transform_2, window_bounds = array<i64: 32, 128>}, {transform_indices = @transform_3, window_bounds = array<i64: 16, 128>}, {transform_indices = @transform_4, window_bounds = array<i64: 16, 128>}]} {
    %c0 = arith.constant 0 : index
    %c0_0 = arith.constant 0 : index
    %c0_1 = arith.constant 0 : index
    %0 = vector.load %arg1[%c0, %c0_0, %c0_1] : memref<16x8x32xf32, #tpu.memory_space<vmem>>, vector<16x8x32xf32>
    %c0_2 = arith.constant 0 : index
    %c0_3 = arith.constant 0 : index
    %1 = vector.load %arg2[%c0_2, %c0_3] : memref<16x8xf32, #tpu.memory_space<vmem>>, vector<16x8xf32>
    %2 = vector.shape_cast %1 : vector<16x8xf32> to vector<16x8x1xf32>
    %3 = vector.broadcast %2 : vector<16x8x1xf32> to vector<16x8x32xf32>
    %4 = arith.mulf %0, %3 : vector<16x8x32xf32>
    %cst = arith.constant dense<0.000000e+00> : vector<16x32xf32>
    %5 = vector.multi_reduction <add>, %4, %cst [1] : vector<16x8x32xf32> to vector<16x32xf32>
    %cst_4 = arith.constant dense<0.000000e+00> : vector<16xf32>
    %6 = vector.multi_reduction <add>, %1, %cst_4 [1] : vector<16x8xf32> to vector<16xf32>
    %7 = vector.shape_cast %6 : vector<16xf32> to vector<16x1xf32>
    %cst_5 = arith.constant 9.99999971E-10 : f32
    %8 = vector.broadcast %cst_5 : f32 to vector<16x1xf32>
    %9 = arith.maximumf %7, %8 : vector<16x1xf32>
    %10 = vector.broadcast %9 : vector<16x1xf32> to vector<16x32xf32>
    %11 = arith.divf %5, %10 : vector<16x32xf32>
    %cst_6 = arith.constant 0.000000e+00 : f32
    %12 = vector.broadcast %cst_6 : f32 to vector<16x128xf32>
    %c0_7 = arith.constant 0 : index
    %c0_8 = arith.constant 0 : index
    %13 = vector.load %arg4[%c0_7, %c0_8] : memref<16x128xf32, #tpu.memory_space<vmem>>, vector<16x128xf32>
    tpu.vector_store %arg4[%c0_7, %c0_8], %12 {strides = array<i32>} : memref<16x128xf32, #tpu.memory_space<vmem>>, vector<16x128xf32>,
    %c0_9 = arith.constant 0 : index
    %c0_10 = arith.constant 0 : index
    %14 = vector.load %arg4[%c0_9, %c0_10] : memref<16x128xf32, #tpu.memory_space<vmem>>, vector<16x32xf32>
    tpu.vector_store %arg4[%c0_9, %c0_10], %11 {strides = array<i32>} : memref<16x128xf32, #tpu.memory_space<vmem>>, vector<16x32xf32>,
    %c0_11 = arith.constant 0 : index
    %c0_12 = arith.constant 0 : index
    %15 = vector.load %arg3[%c0_11, %c0_12] : memref<32x128xf32, #tpu.memory_space<vmem>>, vector<32x128xf32>
    %cst_13 = arith.constant dense<0.000000e+00> : vector<16x128xf32>
    %16 = tpu.matmul %11, %15, %cst_13 {dimension_numbers = #tpu.dot_dimension_numbers<[1], [0], [0], [1], [0, 0, 1, 1], [], []>} : vector<16x32xf32>, vector<32x128xf32>, vector<16x128xf32> -> vector<16x128xf32>
    %c0_14 = arith.constant 0 : index
    %c0_15 = arith.constant 0 : index
    %17 = vector.load %arg5[%c0_14, %c0_15] : memref<16x128xf32, #tpu.memory_space<vmem>>, vector<16x128xf32>
    tpu.vector_store %arg5[%c0_14, %c0_15], %16 {strides = array<i32>} : memref<16x128xf32, #tpu.memory_space<vmem>>, vector<16x128xf32>,
    return
  }
  func.func @transform_0(%arg0: i32) -> (i32, i32, i32) {
    %c0_i32 = arith.constant 0 : i32
    %c0_i32_0 = arith.constant 0 : i32
    %c0_i32_1 = arith.constant 0 : i32
    return %arg0, %c0_i32, %c0_i32_0 : i32, i32, i32
  }
  func.func @transform_1(%arg0: i32) -> (i32, i32) {
    %c0_i32 = arith.constant 0 : i32
    %c0_i32_0 = arith.constant 0 : i32
    return %arg0, %c0_i32 : i32, i32
  }
  func.func @transform_2(%arg0: i32) -> (i32, i32) {
    %c0_i32 = arith.constant 0 : i32
    %c0_i32_0 = arith.constant 0 : i32
    %c0_i32_1 = arith.constant 0 : i32
    return %c0_i32, %c0_i32_0 : i32, i32
  }
  func.func @transform_3(%arg0: i32) -> (i32, i32) {
    %c0_i32 = arith.constant 0 : i32
    %c0_i32_0 = arith.constant 0 : i32
    return %arg0, %c0_i32 : i32, i32
  }
  func.func @transform_4(%arg0: i32) -> (i32, i32) {
    %c0_i32 = arith.constant 0 : i32
    %c0_i32_0 = arith.constant 0 : i32
    return %arg0, %c0_i32 : i32, i32
  }
}

</mosaic_0001>

<llo_original>
// kernel: tpu_custom_call.1
$region0: #{tpu_custom_call.1}
  #allocation0 [shape = 'u32[]', space=smem, size = 0x4, offset = 0x4, fixed_abs, tag = 'smem constant byte address 0x4 - core index']
  #allocation1 [shape = 'u32[144,128]{1,0:T(1,128)}', space=vmem, size = 0x12000, scoped, tag = 'internal scratch']
  %s0 = inlined_call_operand.hbm [shape: f32[16,8,32], index: 0, kind: input, shape index: {}]
  %s1 = inlined_call_operand.vmem [shape: f32[16,8], index: 1, kind: input, shape index: {}]
  %s2 = inlined_call_operand.hbm [shape: f32[32,128], index: 2, kind: input, shape index: {}]
  %s3 = inlined_call_operand.hbm [shape: f32[16,128], index: 3, kind: output, shape index: {0}]
  %s4 = inlined_call_operand.hbm [shape: f32[16,128], index: 4, kind: output, shape index: {1}]
  %5 = xla_tuple %s3, %s4
  %s6 = sld [smem:[#allocation0]]
  $region38: #{tpu_custom_call.1} parent=0
    _
  %s8 = ssub.s32 1, %s6
  %s9 = scalar_select 0, %s8, %s6
  $region1: #{tpu_custom_call.1} parent=0
    #allocation2 [shape = 'u8[65536]{0}', space=vmem, size = 0x10000, scoped, tag = 'input window, operand 0, single buffered']
    #allocation3 [shape = 's32[1]{0}', space=sflag, size = 0x4, scoped, tag = 'scoped memory for tpu_custom_call.1']
    #allocation4 [shape = 's32[1]{0}', space=sflag, size = 0x4, scoped, tag = 'scoped memory for tpu_custom_call.1']
    #allocation5 [shape = 'u8[16384]{0}', space=vmem, size = 0x4000, scoped, tag = 'input window, operand 2, single buffered']
    #allocation6 [shape = 's32[1]{0}', space=sflag, size = 0x4, scoped, tag = 'scoped memory for tpu_custom_call.1']
    #allocation7 [shape = 'u8[8192]{0}', space=vmem, size = 0x2000, scoped, tag = 'output window, operand 0, single buffered']
    #allocation8 [shape = 'u8[8192]{0}', space=vmem, size = 0x2000, scoped, tag = 'output window, operand 1, single buffered']
    #allocation9 [shape = 's32[1]{0}', space=sflag, size = 0x4, scoped, tag = 'scoped memory for tpu_custom_call.1']
    %10 = vsyncpa [#allocation3], 0
    %11 = vsyncpa [#allocation6], 0
    %12 = vsyncpa [#allocation4], 0
    %13 = vsyncpa [#allocation9], 0
    // Predicated region
    $region2: #{tpu_custom_call.1} parent=1 // pred_check
      _
    $region3: #{tpu_custom_call.1} parent=1 // pred_check_branch
      %15 = sbr.rel (0) target = $region5
    $region4: #{tpu_custom_call.1} parent=1 // pred_region
      %s17 = ssub.s32 2048, 2048
      %18 = vsyncadd [#allocation3], %s17
      %s19 = sshll.u32 [#allocation2], 4
      %s20 = int_to_ptr.vmem [resolvable:$true] %s19
      %25 = dma.hbm_to_vmem [thread:$0]  %s0, 2048, %s20, [#allocation3], 128, 128, 8
    $region5: #{tpu_custom_call.1} parent=1 // pred_fallthru
      _
    // Predicated region
    $region6: #{tpu_custom_call.1} parent=1 // pred_check
      _
    $region7: #{tpu_custom_call.1} parent=1 // pred_check_branch
      %27 = sbr.rel (0) target = $region9
    $region8: #{tpu_custom_call.1} parent=1 // pred_region
      _
    $region9: #{tpu_custom_call.1} parent=1 // pred_fallthru
      _
    // Predicated region
    $region10: #{tpu_custom_call.1} parent=1 // pred_check
      _
    $region11: #{tpu_custom_call.1} parent=1 // pred_check_branch
      %29 = sbr.rel (0) target = $region13
    $region12: #{tpu_custom_call.1} parent=1 // pred_region
      %s31 = ssub.s32 512, 512
      %32 = vsyncadd [#allocation6], %s31
      %s33 = sshll.u32 [#allocation5], 4
      %s34 = int_to_ptr.vmem [resolvable:$true] %s33
      %39 = dma.hbm_to_vmem [thread:$0]  %s2, 512, %s34, [#allocation6], 128, 128, 8
    $region13: #{tpu_custom_call.1} parent=1 // pred_fallthru
      _
    // Predicated region
    $region14: #{tpu_custom_call.1} parent=1 // pred_check
      _
    $region15: #{tpu_custom_call.1} parent=1 // pred_check_branch
      %41 = sbr.rel (0) target = $region17
    $region16: #{tpu_custom_call.1} parent=1 // pred_region
      %42 = dma.done [#allocation3], 2048
    $region17: #{tpu_custom_call.1} parent=1 // pred_fallthru
      _
    // Predicated region
    $region18: #{tpu_custom_call.1} parent=1 // pred_check
      _
    $region19: #{tpu_custom_call.1} parent=1 // pred_check_branch
      %44 = sbr.rel (0) target = $region21
    $region20: #{tpu_custom_call.1} parent=1 // pred_region
      %45 = dma.done [#allocation6], 512
    $region21: #{tpu_custom_call.1} parent=1 // pred_fallthru
      _
    %v46 = vld [vmem:[#allocation2] sm:$0xff]
    %v47 = vld [vmem:[#allocation2 + $0x8] sm:$0xff]
    %v48 = vld [vmem:[#allocation2 + $0x10] sm:$0xff]
    %v49 = vld [vmem:[#allocation2 + $0x18] sm:$0xff]
    %v50 = vld [vmem:[#allocation2 + $0x20] sm:$0xff]
    %v51 = vld [vmem:[#allocation2 + $0x28] sm:$0xff]
    %v52 = vld [vmem:[#allocation2 + $0x30] sm:$0xff]
    %v53 = vld [vmem:[#allocation2 + $0x38] sm:$0xff]
    %v54 = vld [vmem:[#allocation2 + $0x40] sm:$0xff]
    %v55 = vld [vmem:[#allocation2 + $0x48] sm:$0xff]
    %v56 = vld [vmem:[#allocation2 + $0x50] sm:$0xff]
    %v57 = vld [vmem:[#allocation2 + $0x58] sm:$0xff]
    %v58 = vld [vmem:[#allocation2 + $0x60] sm:$0xff]
    %v59 = vld [vmem:[#allocation2 + $0x68] sm:$0xff]
    %v60 = vld [vmem:[#allocation2 + $0x70] sm:$0xff]
    %v61 = vld [vmem:[#allocation2 + $0x78] sm:$0xff]
    %v62 = vld [vmem:[%s1] sm:$0xff]
    %v63 = vld [vmem:[%s1 + $0x8] sm:$0xff]
    %v64 = vlaneseq
    %v65 = vshrl.u32 %v64, 7
    %v66 = vsub.s32 0, %v65
    %v67 = vrot.slane %v62, %v66
    %69 = vbcast.lane.b32.xlu0 %v67, 256
    %v70 = vpop.permute.xlu0 %69
    %v71 = vlaneseq
    %v72 = vshrl.u32 %v71, 7
    %v73 = vsub.s32 1, %v72
    %v74 = vrot.slane %v62, %v73
    %76 = vbcast.lane.b32.xlu0 %v74, 256
    %v77 = vpop.permute.xlu0 %76
    %v78 = vlaneseq
    %v79 = vshrl.u32 %v78, 7
    %v80 = vsub.s32 2, %v79
    %v81 = vrot.slane %v62, %v80
    %83 = vbcast.lane.b32.xlu0 %v81, 256
    %v84 = vpop.permute.xlu0 %83
    %v85 = vlaneseq
    %v86 = vshrl.u32 %v85, 7
    %v87 = vsub.s32 3, %v86
    %v88 = vrot.slane %v62, %v87
    %90 = vbcast.lane.b32.xlu0 %v88, 256
    %v91 = vpop.permute.xlu0 %90
    %v92 = vlaneseq
    %v93 = vshrl.u32 %v92, 7
    %v94 = vsub.s32 4, %v93
    %v95 = vrot.slane %v62, %v94
    %97 = vbcast.lane.b32.xlu0 %v95, 256
    %v98 = vpop.permute.xlu0 %97
    %v99 = vlaneseq
    %v100 = vshrl.u32 %v99, 7
    %v101 = vsub.s32 5, %v100
    %v102 = vrot.slane %v62, %v101
    %104 = vbcast.lane.b32.xlu0 %v102, 256
    %v105 = vpop.permute.xlu0 %104
    %v106 = vlaneseq
    %v107 = vshrl.u32 %v106, 7
    %v108 = vsub.s32 6, %v107
    %v109 = vrot.slane %v62, %v108
    %111 = vbcast.lane.b32.xlu0 %v109, 256
    %v112 = vpop.permute.xlu0 %111
    %v113 = vlaneseq
    %v114 = vshrl.u32 %v113, 7
    %v115 = vsub.s32 7, %v114
    %v116 = vrot.slane %v62, %v115
    %118 = vbcast.lane.b32.xlu0 %v116, 256
    %v119 = vpop.permute.xlu0 %118
    %v120 = vlaneseq
    %v121 = vshrl.u32 %v120, 7
    %v122 = vsub.s32 0, %v121
    %v123 = vrot.slane %v63, %v122
    %125 = vbcast.lane.b32.xlu0 %v123, 256
    %v126 = vpop.permute.xlu0 %125
    %v127 = vlaneseq
    %v128 = vshrl.u32 %v127, 7
    %v129 = vsub.s32 1, %v128
    %v130 = vrot.slane %v63, %v129
    %132 = vbcast.lane.b32.xlu0 %v130, 256
    %v133 = vpop.permute.xlu0 %132
    %v134 = vlaneseq
    %v135 = vshrl.u32 %v134, 7
    %v136 = vsub.s32 2, %v135
    %v137 = vrot.slane %v63, %v136
    %139 = vbcast.lane.b32.xlu0 %v137, 256
    %v140 = vpop.permute.xlu0 %139
    %v141 = vlaneseq
    %v142 = vshrl.u32 %v141, 7
    %v143 = vsub.s32 3, %v142
    %v144 = vrot.slane %v63, %v143
    %146 = vbcast.lane.b32.xlu0 %v144, 256
    %v147 = vpop.permute.xlu0 %146
    %v148 = vlaneseq
    %v149 = vshrl.u32 %v148, 7
    %v150 = vsub.s32 4, %v149
    %v151 = vrot.slane %v63, %v150
    %153 = vbcast.lane.b32.xlu0 %v151, 256
    %v154 = vpop.permute.xlu0 %153
    %v155 = vlaneseq
    %v156 = vshrl.u32 %v155, 7
    %v157 = vsub.s32 5, %v156
    %v158 = vrot.slane %v63, %v157
    %160 = vbcast.lane.b32.xlu0 %v158, 256
    %v161 = vpop.permute.xlu0 %160
    %v162 = vlaneseq
    %v163 = vshrl.u32 %v162, 7
    %v164 = vsub.s32 6, %v163
    %v165 = vrot.slane %v63, %v164
    %167 = vbcast.lane.b32.xlu0 %v165, 256
    %v168 = vpop.permute.xlu0 %167
    %v169 = vlaneseq
    %v170 = vshrl.u32 %v169, 7
    %v171 = vsub.s32 7, %v170
    %v172 = vrot.slane %v63, %v171
    %174 = vbcast.lane.b32.xlu0 %v172, 256
    %v175 = vpop.permute.xlu0 %174
    %v176 = vmul.f32 %v46, %v70
    %v177 = vmul.f32 %v47, %v77
    %v178 = vmul.f32 %v48, %v84
    %v179 = vmul.f32 %v49, %v91
    %v180 = vmul.f32 %v50, %v98
    %v181 = vmul.f32 %v51, %v105
    %v182 = vmul.f32 %v52, %v112
    %v183 = vmul.f32 %v53, %v119
    %v184 = vmul.f32 %v54, %v126
    %v185 = vmul.f32 %v55, %v133
    %v186 = vmul.f32 %v56, %v140
    %v187 = vmul.f32 %v57, %v147
    %v188 = vmul.f32 %v58, %v154
    %v189 = vmul.f32 %v59, %v161
    %v190 = vmul.f32 %v60, %v168
    %v191 = vmul.f32 %v61, %v175
    %vm192 = vcmask 261120
    %v193 = vsel %vm192, %v176, 0.0
    %v194 = vrot.slane %v193, 4
    %v195 = vadd.f32 %v193, %v194
    %v196 = vrot.slane %v195, 2
    %v197 = vadd.f32 %v195, %v196
    %v198 = vrot.slane %v197, 1
    %v199 = vadd.f32 %v197, %v198
    %v200 = vsel %vm192, %v177, 0.0
    %v201 = vrot.slane %v200, 4
    %v202 = vadd.f32 %v200, %v201
    %v203 = vrot.slane %v202, 2
    %v204 = vadd.f32 %v202, %v203
    %v205 = vrot.slane %v204, 1
    %v206 = vadd.f32 %v204, %v205
    %v207 = vsel %vm192, %v178, 0.0
    %v208 = vrot.slane %v207, 4
    %v209 = vadd.f32 %v207, %v208
    %v210 = vrot.slane %v209, 2
    %v211 = vadd.f32 %v209, %v210
    %v212 = vrot.slane %v211, 1
    %v213 = vadd.f32 %v211, %v212
    %v214 = vsel %vm192, %v179, 0.0
    %v215 = vrot.slane %v214, 4
    %v216 = vadd.f32 %v214, %v215
    %v217 = vrot.slane %v216, 2
    %v218 = vadd.f32 %v216, %v217
    %v219 = vrot.slane %v218, 1
    %v220 = vadd.f32 %v218, %v219
    %v221 = vsel %vm192, %v180, 0.0
    %v222 = vrot.slane %v221, 4
    %v223 = vadd.f32 %v221, %v222
    %v224 = vrot.slane %v223, 2
    %v225 = vadd.f32 %v223, %v224
    %v226 = vrot.slane %v225, 1
    %v227 = vadd.f32 %v225, %v226
    %v228 = vsel %vm192, %v181, 0.0
    %v229 = vrot.slane %v228, 4
    %v230 = vadd.f32 %v228, %v229
    %v231 = vrot.slane %v230, 2
    %v232 = vadd.f32 %v230, %v231
    %v233 = vrot.slane %v232, 1
    %v234 = vadd.f32 %v232, %v233
    %v235 = vsel %vm192, %v182, 0.0
    %v236 = vrot.slane %v235, 4
    %v237 = vadd.f32 %v235, %v236
    %v238 = vrot.slane %v237, 2
    %v239 = vadd.f32 %v237, %v238
    %v240 = vrot.slane %v239, 1
    %v241 = vadd.f32 %v239, %v240
    %v242 = vsel %vm192, %v183, 0.0
    %v243 = vrot.slane %v242, 4
    %v244 = vadd.f32 %v242, %v243
    %v245 = vrot.slane %v244, 2
    %v246 = vadd.f32 %v244, %v245
    %v247 = vrot.slane %v246, 1
    %v248 = vadd.f32 %v246, %v247
    %v249 = vsel %vm192, %v184, 0.0
    %v250 = vrot.slane %v249, 4
    %v251 = vadd.f32 %v249, %v250
    %v252 = vrot.slane %v251, 2
    %v253 = vadd.f32 %v251, %v252
    %v254 = vrot.slane %v253, 1
    %v255 = vadd.f32 %v253, %v254
    %v256 = vsel %vm192, %v185, 0.0
    %v257 = vrot.slane %v256, 4
    %v258 = vadd.f32 %v256, %v257
    %v259 = vrot.slane %v258, 2
    %v260 = vadd.f32 %v258, %v259
    %v261 = vrot.slane %v260, 1
    %v262 = vadd.f32 %v260, %v261
    %v263 = vsel %vm192, %v186, 0.0
    %v264 = vrot.slane %v263, 4
    %v265 = vadd.f32 %v263, %v264
    %v266 = vrot.slane %v265, 2
    %v267 = vadd.f32 %v265, %v266
    %v268 = vrot.slane %v267, 1
    %v269 = vadd.f32 %v267, %v268
    %v270 = vsel %vm192, %v187, 0.0
    %v271 = vrot.slane %v270, 4
    %v272 = vadd.f32 %v270, %v271
    %v273 = vrot.slane %v272, 2
    %v274 = vadd.f32 %v272, %v273
    %v275 = vrot.slane %v274, 1
    %v276 = vadd.f32 %v274, %v275
    %v277 = vsel %vm192, %v188, 0.0
    %v278 = vrot.slane %v277, 4
    %v279 = vadd.f32 %v277, %v278
    %v280 = vrot.slane %v279, 2
    %v281 = vadd.f32 %v279, %v280
    %v282 = vrot.slane %v281, 1
    %v283 = vadd.f32 %v281, %v282
    %v284 = vsel %vm192, %v189, 0.0
    %v285 = vrot.slane %v284, 4
    %v286 = vadd.f32 %v284, %v285
    %v287 = vrot.slane %v286, 2
    %v288 = vadd.f32 %v286, %v287
    %v289 = vrot.slane %v288, 1
    %v290 = vadd.f32 %v288, %v289
    %v291 = vsel %vm192, %v190, 0.0
    %v292 = vrot.slane %v291, 4
    %v293 = vadd.f32 %v291, %v292
    %v294 = vrot.slane %v293, 2
    %v295 = vadd.f32 %v293, %v294
    %v296 = vrot.slane %v295, 1
    %v297 = vadd.f32 %v295, %v296
    %v298 = vsel %vm192, %v191, 0.0
    %v299 = vrot.slane %v298, 4
    %v300 = vadd.f32 %v298, %v299
    %v301 = vrot.slane %v300, 2
    %v302 = vadd.f32 %v300, %v301
    %v303 = vrot.slane %v302, 1
    %v304 = vadd.f32 %v302, %v303
    %vm305 = vcmask 64512
    %v306 = vsel %vm305, %v62, 0.0
    %307 = vadd.xlane.f32.xlu0 %v306
    %v308 = vpop.xlane.xlu0 %307
    %v309 = vsel %vm305, %v63, 0.0
    %310 = vadd.xlane.f32.xlu0 %v309
    %v311 = vpop.xlane.xlu0 %310
    %v312 = vmax.f32 %v308, 1e-09
    %v313 = vmax.f32 %v311, 1e-09
    %v316 = vrot.slane %v312, 1
    %v317 = vrot.slane %v312, 2
    %v318 = vrot.slane %v312, 3
    %v319 = vrot.slane %v312, 4
    %v320 = vrot.slane %v312, 5
    %v321 = vrot.slane %v312, 6
    %v322 = vrot.slane %v312, 7
    %v323 = vrot.slane %v313, 1
    %v324 = vrot.slane %v313, 2
    %v325 = vrot.slane %v313, 3
    %v326 = vrot.slane %v313, 4
    %v327 = vrot.slane %v313, 5
    %v328 = vrot.slane %v313, 6
    %v329 = vrot.slane %v313, 7
    %v346 = vrcp.pop %v312
    %v347 = vmul.f32 %v199, %v346
    %v348 = vrcp.pop %v316
    %v349 = vmul.f32 %v206, %v348
    %v350 = vrcp.pop %v317
    %v351 = vmul.f32 %v213, %v350
    %v352 = vrcp.pop %v318
    %v353 = vmul.f32 %v220, %v352
    %v354 = vrcp.pop %v319
    %v355 = vmul.f32 %v227, %v354
    %v356 = vrcp.pop %v320
    %v357 = vmul.f32 %v234, %v356
    %v358 = vrcp.pop %v321
    %v359 = vmul.f32 %v241, %v358
    %v360 = vrcp.pop %v322
    %v361 = vmul.f32 %v248, %v360
    %v362 = vrcp.pop %v313
    %v363 = vmul.f32 %v255, %v362
    %v364 = vrcp.pop %v323
    %v365 = vmul.f32 %v262, %v364
    %v366 = vrcp.pop %v324
    %v367 = vmul.f32 %v269, %v366
    %v368 = vrcp.pop %v325
    %v369 = vmul.f32 %v276, %v368
    %v370 = vrcp.pop %v326
    %v371 = vmul.f32 %v283, %v370
    %v372 = vrcp.pop %v327
    %v373 = vmul.f32 %v290, %v372
    %v374 = vrcp.pop %v328
    %v375 = vmul.f32 %v297, %v374
    %v376 = vrcp.pop %v329
    %v377 = vmul.f32 %v304, %v376
    %378 = vst [vmem:[#allocation7] sm:$0xff] 0.0
    %379 = vst [vmem:[#allocation7 + $0x8] sm:$0xff] 0.0
    %v396 = vrot.slane %v349, 7
    %vm397 = vcmask 1041409
    %v398 = vsel %vm397, %v396, %v347
    %v399 = vrot.slane %v351, 6
    %vm400 = vcmask 1042434
    %v401 = vsel %vm400, %v399, %v398
    %v402 = vrot.slane %v353, 5
    %vm403 = vcmask 1043459
    %v404 = vsel %vm403, %v402, %v401
    %v405 = vrot.slane %v355, 4
    %vm406 = vcmask 1044484
    %v407 = vsel %vm406, %v405, %v404
    %v408 = vrot.slane %v357, 3
    %vm409 = vcmask 1045509
    %v410 = vsel %vm409, %v408, %v407
    %v411 = vrot.slane %v359, 2
    %vm412 = vcmask 1046534
    %v413 = vsel %vm412, %v411, %v410
    %v414 = vrot.slane %v361, 1
    %vm415 = vcmask 1047559
    %v416 = vsel %vm415, %v414, %v413
    %v417 = vrot.slane %v365, 7
    %v418 = vsel %vm397, %v417, %v363
    %v419 = vrot.slane %v367, 6
    %v420 = vsel %vm400, %v419, %v418
    %v421 = vrot.slane %v369, 5
    %v422 = vsel %vm403, %v421, %v420
    %v423 = vrot.slane %v371, 4
    %v424 = vsel %vm406, %v423, %v422
    %v425 = vrot.slane %v373, 3
    %v426 = vsel %vm409, %v425, %v424
    %v427 = vrot.slane %v375, 2
    %v428 = vsel %vm412, %v427, %v426
    %v429 = vrot.slane %v377, 1
    %v430 = vsel %vm415, %v429, %v428
    %433 = vst.msk [vmem:[#allocation7] sm:$0xff] %vm192, %v416
    %434 = vst.msk [vmem:[#allocation7 + $0x8] sm:$0xff] %vm192, %v430
    %v435 = vld [vmem:[#allocation5] sm:$0xff]
    %v436 = vld [vmem:[#allocation5 + $0x8] sm:$0xff]
    %v437 = vld [vmem:[#allocation5 + $0x10] sm:$0xff]
    %v438 = vld [vmem:[#allocation5 + $0x18] sm:$0xff]
    %v439 = vsel %vm192, %v416, 0
    %v441 = vsel %vm192, %v430, 0
    %443 = vmatprep.subr.mxu0 0.0
    %444 = vmatpush1.msra.mxu0 %v435
    %445 = vmatprep.subr.mxu0 0.0
    %446 = vmatpush1.msra.mxu0 %v436
    %447 = vmatprep.subr.mxu0 0.0
    %448 = vmatpush1.msra.mxu0 %v437
    %449 = vmatprep.subr.mxu0 0.0
    %450 = vmatpush1.msra.mxu0 %v438
    %451 = vmatprep.subr.mxu0 0.0
    %452 = vmatpush1.msra.mxu0 0.0
    %453 = vmatprep.subr.mxu0 0.0
    %454 = vmatpush1.msra.mxu0 0.0
    %455 = vmatprep.subr.mxu0 0.0
    %456 = vmatpush1.msra.mxu0 0.0
    %457 = vmatprep.subr.mxu0 0.0
    %458 = vmatpush1.msra.mxu0 0.0
    %459 = vmatprep.subr.mxu0 0.0
    %460 = vmatpush1.msra.mxu0 0.0
    %461 = vmatprep.subr.mxu0 0.0
    %462 = vmatpush1.msra.mxu0 0.0
    %463 = vmatprep.subr.mxu0 0.0
    %464 = vmatpush1.msra.mxu0 0.0
    %465 = vmatprep.subr.mxu0 0.0
    %466 = vmatpush1.msra.mxu0 0.0
    %467 = vmatprep.subr.mxu0 0.0
    %468 = vmatpush1.msra.mxu0 0.0
    %469 = vmatprep.subr.mxu0 0.0
    %470 = vmatpush1.msra.mxu0 0.0
    %471 = vmatprep.subr.mxu0 0.0
    %472 = vmatpush1.msra.mxu0 0.0
    %473 = vmatprep.subr.mxu0 0.0
    %474 = vmatpush1.msra.mxu0 0.0
    %475 = vmatprep.subr.mxu0 0.0
    %476 = vmatpush1.msra.mxu0 0.0
    %477 = vmatprep.subr.mxu0 0.0
    %478 = vmatpush1.msra.mxu0 0.0
    %479 = vmatprep.subr.mxu0 0.0
    %480 = vmatpush1.msra.mxu0 0.0
    %481 = vmatprep.subr.mxu0 0.0
    %482 = vmatpush1.msra.mxu0 0.0
    %483 = vmatprep.subr.mxu0 0.0
    %484 = vmatpush1.msra.mxu0 0.0
    %485 = vmatprep.subr.mxu0 0.0
    %486 = vmatpush1.msra.mxu0 0.0
    %487 = vmatprep.subr.mxu0 0.0
    %488 = vmatpush1.msra.mxu0 0.0
    %489 = vmatprep.subr.mxu0 0.0
    %490 = vmatpush1.msra.mxu0 0.0
    %491 = vmatprep.subr.mxu0 0.0
    %492 = vmatpush1.msra.mxu0 0.0
    %493 = vmatprep.subr.mxu0 0.0
    %494 = vmatpush1.msra.mxu0 0.0
    %495 = vmatprep.subr.mxu0 0.0
    %496 = vmatpush1.msra.mxu0 0.0
    %497 = vmatprep.subr.mxu0 0.0
    %498 = vmatpush1.msra.mxu0 0.0
    %499 = vmatprep.subr.mxu0 0.0
    %500 = vmatpush1.msra.mxu0 0.0
    %501 = vmatprep.subr.mxu0 0.0
    %502 = vmatpush1.msra.mxu0 0.0
    %503 = vmatprep.subr.mxu0 0.0
    %504 = vmatpush1.msra.mxu0 0.0
    %505 = vmatprep.subr.mxu0 0.0
    %506 = vmatpush1.msra.mxu0 0.0
    %507 = vmatprep.mubr.f32.mxu0 0.0
    %508 = vmatmul.mubr.f32.gmra.mrb[0].mxu0 %v439
    %v509 = vpop.f32.mrb[0].mxu0
    %v510 = vadd.f32 0.0, %v509
    %v511 = vpop.f32.mrb[0].mxu0
    %512 = vmatprep.mubr.f32.mxu0 0.0
    %513 = vmatmul.mubr.f32.gmra.mrb[0].mxu0 %v441
    %v514 = vpop.f32.mrb[0].mxu0
    %v515 = vadd.f32 0.0, %v514
    %v516 = vpop.f32.mrb[0].mxu0
    %517 = vdwg.mxu0
    %518 = vst [vmem:[#allocation8] sm:$0xff] %v510
    %519 = vst [vmem:[#allocation8 + $0x8] sm:$0xff] %v515
    // Predicated region
    $region22: #{tpu_custom_call.1} parent=1 // pred_check
      _
    $region23: #{tpu_custom_call.1} parent=1 // pred_check_branch
      %521 = sbr.rel (0) target = $region25
    $region24: #{tpu_custom_call.1} parent=1 // pred_region
      %s523 = ssub.s32 256, 256
      %524 = vsyncadd [#allocation4], %s523
      %s525 = sshll.u32 [#allocation7], 4
      %s526 = int_to_ptr.vmem [resolvable:$true] %s525
      %531 = dma.vmem_to_hbm [thread:$0]  %s526, 256, %s3, [#allocation4], 128, 128, 8
    $region25: #{tpu_custom_call.1} parent=1 // pred_fallthru
      _
    // Predicated region
    $region26: #{tpu_custom_call.1} parent=1 // pred_check
      _
    $region27: #{tpu_custom_call.1} parent=1 // pred_check_branch
      %533 = sbr.rel (0) target = $region29
    $region28: #{tpu_custom_call.1} parent=1 // pred_region
      %s535 = ssub.s32 256, 256
      %536 = vsyncadd [#allocation9], %s535
      %s537 = sshll.u32 [#allocation8], 4
      %s538 = int_to_ptr.vmem [resolvable:$true] %s537
      %543 = dma.vmem_to_hbm [thread:$0]  %s538, 256, %s4, [#allocation9], 128, 128, 8
    $region29: #{tpu_custom_call.1} parent=1 // pred_fallthru
      _
    // Predicated region
    $region30: #{tpu_custom_call.1} parent=1 // pred_check
      _
    $region31: #{tpu_custom_call.1} parent=1 // pred_check_branch
      %545 = sbr.rel (0) target = $region33
    $region32: #{tpu_custom_call.1} parent=1 // pred_region
      %546 = dma.done [#allocation4], 256
    $region33: #{tpu_custom_call.1} parent=1 // pred_fallthru
      _
    // Predicated region
    $region34: #{tpu_custom_call.1} parent=1 // pred_check
      _
    $region35: #{tpu_custom_call.1} parent=1 // pred_check_branch
      %548 = sbr.rel (0) target = $region37
    $region36: #{tpu_custom_call.1} parent=1 // pred_region
      %549 = dma.done [#allocation9], 256
    $region37: #{tpu_custom_call.1} parent=1 // pred_fallthru
      _
    %550 = vsyncpa [#allocation3], 1
    %551 = vsyncpa [#allocation6], 1
    %552 = vsyncpa [#allocation4], 1
    %553 = vsyncpa [#allocation9], 1

</llo_original>
